<compile_context>
chip_gen: v6e
topology: v6e:2x2x1
jax: 0.10.0
libtpu: 0.0.40
codegen_flags: <defaults>
</compile_context>

<pallas_src>
import functools

import jax
import jax.numpy as jnp
from jax.experimental import pallas as pl
from jax.experimental.pallas import tpu as pltpu


def _make_kernel(kernel_size, pre_mask, post_mask, with_pre_norm, L, eps):
    pad = (kernel_size - 1) // 2
    inv_k = 1.0 / kernel_size

    def kernel(seq_ref, mask_ref, gamma_ref, beta_ref, out_ref):
        x = seq_ref[...].astype(jnp.float32)            # (tb, C, L)
        keep = mask_ref[...] == 1                       # (tb, 1, L) -> bcast over C

        if with_pre_norm:
            # LayerNorm over the channel axis (axis 1), biased variance, affine.
            mean = jnp.mean(x, axis=1, keepdims=True)           # (tb, 1, L)
            centered = x - mean
            var = jnp.mean(centered * centered, axis=1, keepdims=True)
            x = centered * jax.lax.rsqrt(var + eps) * gamma_ref[...] + beta_ref[...]

        if pre_mask:
            x = jnp.where(keep, x, 0.0)

        # AvgPool1d(k, stride=1, padding=pad, count_include_pad=True):
        # stride-1 windowed sum via circular shifts; the wrapped lanes are
        # zeroed with one hoisted (1,1,L) lane-iota compare per shift, which
        # also implements the zero padding at the sequence edges.
        # TODO(synk): for large kernel_size (pad >~ 8) replace this loop with a
        # single MXU matmul against a banded Toeplitz matrix (1/k in the band).
        acc = x
        if pad > 0:
            lane = jax.lax.broadcasted_iota(jnp.int32, (1, 1, L), 2)
            for d in range(1, pad + 1):
                y_p = jnp.roll(x, -d, axis=2)     # y_p[..., i] = x[..., i + d]
                y_m = jnp.roll(x, d, axis=2)      # y_m[..., i] = x[..., i - d]
                y_p = jnp.where(lane + d < L, y_p, 0.0)
                y_m = jnp.where(lane >= d, y_m, 0.0)
                acc = acc + y_p + y_m
        res = acc * jnp.float32(inv_k)

        if post_mask:                             # fold mask into the final store
            res = jnp.where(keep, res, 0.0)
        out_ref[...] = res.astype(out_ref.dtype)

    return kernel


def avg_pool_pallas(seq, mask, gamma, beta, *, kernel_size, pre_mask, post_mask,
                    with_pre_norm, eps=1e-5):
    """seq: (B, C, L); mask: (B, L) of {0,1}; gamma/beta: (C,)."""
    # TODO(synk): even kernel sizes change the output length (L-1) in PyTorch;
    # only odd kernel sizes are supported here.
    assert kernel_size % 2 == 1, "only odd kernel sizes supported (output length == L)"
    B, C, L = seq.shape

    # Reshapes only (no full-tensor pad/slice passes over HBM).
    mask3 = mask.reshape(B, 1, L).astype(jnp.int32)
    # TODO(synk): mask could be shipped as int8 to shave DMA bytes for small C.
    gamma3 = jnp.asarray(gamma, jnp.float32).reshape(1, C, 1)
    beta3 = jnp.asarray(beta, jnp.float32).reshape(1, C, 1)

    # ---- Tiling: pick tb (batch rows per grid step) by bytes, not a hard cap.
    try:
        vmem_cap = int(pltpu.get_tpu_info().vmem_capacity_bytes)
    except Exception:
        vmem_cap = 64 * 1024 * 1024            # conservative fallback (v7x-sized)
    # Half of physical VMEM as the scoped limit: 32 MiB on v7x, 64 MiB on v5e/v6e.
    vmem_limit = int(min(vmem_cap // 2, 96 * 1024 * 1024))

    bytes_per_row = 4 * C * L                  # one (C, L) f32 slab
    # Working set per grid step ~ 2x(in) + 2x(out) double-buffered + ~4 f32
    # temporaries (x / rolls / acc) ~= 8 blocks; keep the block itself at
    # ~1-8 MiB (HBM-roofline sweet spot) and within the VMEM budget.
    block_budget = max(bytes_per_row, min(8 * 1024 * 1024, vmem_limit // 8))
    tb = max(1, min(B, block_budget // bytes_per_row))
    if B >= 4:
        # Keep >= 4 grid steps: pipeline overlap on 1-TC parts, balanced work
        # across both TensorCores on v7x under dimension_semantics=("parallel",).
        tb = min(tb, pl.cdiv(B, 4))
    grid = (pl.cdiv(B, tb),)                   # ragged last block handled by Pallas
    # TODO(synk): for very large C*L (a single batch row exceeding the block
    # budget) add L-tiling with a `pad`-column halo; not needed at these sizes.

    kernel = _make_kernel(kernel_size, pre_mask, post_mask, with_pre_norm, L, eps)

    out = pl.pallas_call(
        kernel,
        out_shape=jax.ShapeDtypeStruct((B, C, L), seq.dtype),
        grid_spec=pltpu.PrefetchScalarGridSpec(
            num_scalar_prefetch=0,
            grid=grid,
            in_specs=[
                pl.BlockSpec((tb, C, L), lambda i: (i, 0, 0)),   # seq
                pl.BlockSpec((tb, 1, L), lambda i: (i, 0, 0)),   # mask
                pl.BlockSpec((1, C, 1), lambda i: (0, 0, 0)),    # gamma
                pl.BlockSpec((1, C, 1), lambda i: (0, 0, 0)),    # beta
            ],
            out_specs=pl.BlockSpec((tb, C, L), lambda i: (i, 0, 0)),
        ),
        compiler_params=pltpu.CompilerParams(
            dimension_semantics=("parallel",),
            vmem_limit_bytes=vmem_limit,
        ),
    )(seq, mask3, gamma3, beta3)
    return out


def avg_pool_ref(seq, mask, gamma, beta, *, kernel_size, pre_mask, post_mask,
                 with_pre_norm, eps=1e-5):
    """Pure-JAX reference matching the PyTorch AvgPool module semantics."""
    if with_pre_norm:
        mean = seq.mean(axis=1, keepdims=True)
        var = ((seq - mean) ** 2).mean(axis=1, keepdims=True)
        seq = (seq - mean) / jnp.sqrt(var + eps)
        seq = seq * gamma[None, :, None] + beta[None, :, None]
    keep = mask[:, None, :] == 1
    if pre_mask:
        seq = jnp.where(keep, seq, 0.0)
    pad = (kernel_size - 1) // 2
    L = seq.shape[-1]
    padded = jnp.pad(seq, ((0, 0), (0, 0), (pad, pad)))      # zero padding
    out = padded[..., 0:L]
    for o in range(1, kernel_size):
        out = out + padded[..., o:o + L]
    out = out / kernel_size
    if post_mask:
        out = jnp.where(keep, out, 0.0)
    return out


if __name__ == "__main__":
    B, C, L = 2, 8, 16
    KERNEL_SIZE = 3
    PRE_MASK, POST_MASK, WITH_PRE_NORM = True, True, True

    key = jax.random.PRNGKey(0)
    k_seq, k_mask = jax.random.split(key)
    seq = jax.random.normal(k_seq, (B, C, L), dtype=jnp.float32)
    mask = (jax.random.uniform(k_mask, (B, L)) > 0.3).astype(jnp.int32)

    # Deterministic nontrivial LayerNorm affine params (PyTorch default is
    # ones/zeros; this exercises the affine path).
    gamma = 1.0 + 0.01 * jnp.arange(C, dtype=jnp.float32)
    beta = 0.02 * jnp.arange(C, dtype=jnp.float32)

    run = functools.partial(
        avg_pool_pallas, kernel_size=KERNEL_SIZE, pre_mask=PRE_MASK,
        post_mask=POST_MASK, with_pre_norm=WITH_PRE_NORM)
    out = jax.block_until_ready(run(seq, mask, gamma, beta))

    ref = avg_pool_ref(seq, mask, gamma, beta, kernel_size=KERNEL_SIZE,
                       pre_mask=PRE_MASK, post_mask=POST_MASK,
                       with_pre_norm=WITH_PRE_NORM)
    assert out.shape == (B, C, L)
    assert jnp.allclose(out, ref, atol=1e-5, rtol=1e-5), \
        float(jnp.max(jnp.abs(out - ref)))

    print("KERNEL_OK")
</pallas_src>

<mosaic_0001>
module attributes {stable_mosaic.version = 11 : i64} {
  func.func @kernel(%arg0: i32, %arg1: memref<2x8x16xf32, #tpu.memory_space<vmem>>, %arg2: memref<2x1x16xi32, #tpu.memory_space<vmem>>, %arg3: memref<1x8x1xf32, #tpu.memory_space<vmem>>, %arg4: memref<1x8x1xf32, #tpu.memory_space<vmem>>, %arg5: memref<2x8x16xf32, #tpu.memory_space<vmem>>) attributes {dimension_semantics = [#tpu.dimension_semantics<parallel>], iteration_bounds = array<i64: 1>, scalar_prefetch = 0 : i64, scratch_operands = 0 : i64, tpu.core_type = #tpu.core_type<tc>, window_params = [{transform_indices = @transform_0, window_bounds = array<i64: 2, 8, 16>}, {transform_indices = @transform_1, window_bounds = array<i64: 2, 1, 16>}, {pipeline_mode = #tpu.pipeline_mode<synchronous>, transform_indices = @transform_2, window_bounds = array<i64: 1, 8, 1>}, {pipeline_mode = #tpu.pipeline_mode<synchronous>, transform_indices = @transform_3, window_bounds = array<i64: 1, 8, 1>}, {transform_indices = @transform_4, window_bounds = array<i64: 2, 8, 16>}]} {
    %c0 = arith.constant 0 : index
    %c0_0 = arith.constant 0 : index
    %c0_1 = arith.constant 0 : index
    %0 = vector.load %arg1[%c0, %c0_0, %c0_1] : memref<2x8x16xf32, #tpu.memory_space<vmem>>, vector<2x8x16xf32>
    %c0_2 = arith.constant 0 : index
    %c0_3 = arith.constant 0 : index
    %c0_4 = arith.constant 0 : index
    %1 = vector.load %arg2[%c0_2, %c0_3, %c0_4] : memref<2x1x16xi32, #tpu.memory_space<vmem>>, vector<2x1x16xi32>
    %c1_i32 = arith.constant 1 : i32
    %2 = vector.broadcast %c1_i32 : i32 to vector<2x1x16xi32>
    %3 = arith.cmpi eq, %1, %2 : vector<2x1x16xi32>
    %cst = arith.constant dense<0.000000e+00> : vector<2x16xf32>
    %4 = vector.multi_reduction <add>, %0, %cst [1] : vector<2x8x16xf32> to vector<2x16xf32>
    %5 = vector.shape_cast %4 : vector<2x16xf32> to vector<2x1x16xf32>
    %cst_5 = arith.constant 8.000000e+00 : f32
    %6 = vector.broadcast %cst_5 : f32 to vector<2x1x16xf32>
    %7 = arith.divf %5, %6 : vector<2x1x16xf32>
    %8 = vector.broadcast %7 : vector<2x1x16xf32> to vector<2x8x16xf32>
    %9 = arith.subf %0, %8 : vector<2x8x16xf32>
    %10 = arith.mulf %9, %9 : vector<2x8x16xf32>
    %cst_6 = arith.constant dense<0.000000e+00> : vector<2x16xf32>
    %11 = vector.multi_reduction <add>, %10, %cst_6 [1] : vector<2x8x16xf32> to vector<2x16xf32>
    %12 = vector.shape_cast %11 : vector<2x16xf32> to vector<2x1x16xf32>
    %cst_7 = arith.constant 8.000000e+00 : f32
    %13 = vector.broadcast %cst_7 : f32 to vector<2x1x16xf32>
    %14 = arith.divf %12, %13 : vector<2x1x16xf32>
    %cst_8 = arith.constant 9.99999974E-6 : f32
    %15 = vector.broadcast %cst_8 : f32 to vector<2x1x16xf32>
    %16 = arith.addf %14, %15 : vector<2x1x16xf32>
    %17 = math.rsqrt %16 : vector<2x1x16xf32>
    %18 = vector.broadcast %17 : vector<2x1x16xf32> to vector<2x8x16xf32>
    %19 = arith.mulf %9, %18 : vector<2x8x16xf32>
    %c0_9 = arith.constant 0 : index
    %c0_10 = arith.constant 0 : index
    %c0_11 = arith.constant 0 : index
    %20 = vector.load %arg3[%c0_9, %c0_10, %c0_11] : memref<1x8x1xf32, #tpu.memory_space<vmem>>, vector<1x8x1xf32>
    %21 = vector.broadcast %20 : vector<1x8x1xf32> to vector<2x8x16xf32>
    %22 = arith.mulf %19, %21 : vector<2x8x16xf32>
    %c0_12 = arith.constant 0 : index
    %c0_13 = arith.constant 0 : index
    %c0_14 = arith.constant 0 : index
    %23 = vector.load %arg4[%c0_12, %c0_13, %c0_14] : memref<1x8x1xf32, #tpu.memory_space<vmem>>, vector<1x8x1xf32>
    %24 = vector.broadcast %23 : vector<1x8x1xf32> to vector<2x8x16xf32>
    %25 = arith.addf %22, %24 : vector<2x8x16xf32>
    %cst_15 = arith.constant 0.000000e+00 : f32
    %26 = vector.shape_cast %3 : vector<2x1x16xi1> to vector<2x1x16xi1>
    %27 = vector.broadcast %26 : vector<2x1x16xi1> to vector<2x8x16xi1>
    %28 = vector.broadcast %cst_15 : f32 to vector<2x8x16xf32>
    %29 = arith.select %27, %25, %28 : vector<2x8x16xi1>, vector<2x8x16xf32>
    %30 = tpu.iota {dimensions = array<i32: 2>} : vector<1x1x16xi32>
    %31 = vector.extract_strided_slice %29 {offsets = [0, 0, 1], sizes = [2, 8, 15], strides = [1, 1, 1]} : vector<2x8x16xf32> to vector<2x8x15xf32>
    %32 = vector.extract_strided_slice %29 {offsets = [0, 0, 0], sizes = [2, 8, 1], strides = [1, 1, 1]} : vector<2x8x16xf32> to vector<2x8x1xf32>
    %33 = tpu.concatenate %31, %32 in 2 : vector<2x8x15xf32>, vector<2x8x1xf32> -> vector<2x8x16xf32>
    %34 = vector.extract_strided_slice %29 {offsets = [0, 0, 15], sizes = [2, 8, 1], strides = [1, 1, 1]} : vector<2x8x16xf32> to vector<2x8x1xf32>
    %35 = vector.extract_strided_slice %29 {offsets = [0, 0, 0], sizes = [2, 8, 15], strides = [1, 1, 1]} : vector<2x8x16xf32> to vector<2x8x15xf32>
    %36 = tpu.concatenate %34, %35 in 2 : vector<2x8x1xf32>, vector<2x8x15xf32> -> vector<2x8x16xf32>
    %c1_i32_16 = arith.constant 1 : i32
    %37 = vector.broadcast %c1_i32_16 : i32 to vector<1x1x16xi32>
    %38 = arith.addi %30, %37 : vector<1x1x16xi32>
    %c16_i32 = arith.constant 16 : i32
    %39 = vector.broadcast %c16_i32 : i32 to vector<1x1x16xi32>
    %40 = arith.cmpi slt, %38, %39 : vector<1x1x16xi32>
    %cst_17 = arith.constant 0.000000e+00 : f32
    %41 = vector.shape_cast %40 : vector<1x1x16xi1> to vector<1x1x16xi1>
    %42 = vector.broadcast %41 : vector<1x1x16xi1> to vector<2x8x16xi1>
    %43 = vector.broadcast %cst_17 : f32 to vector<2x8x16xf32>
    %44 = arith.select %42, %33, %43 : vector<2x8x16xi1>, vector<2x8x16xf32>
    %c1_i32_18 = arith.constant 1 : i32
    %45 = vector.broadcast %c1_i32_18 : i32 to vector<1x1x16xi32>
    %46 = arith.cmpi sge, %30, %45 : vector<1x1x16xi32>
    %cst_19 = arith.constant 0.000000e+00 : f32
    %47 = vector.shape_cast %46 : vector<1x1x16xi1> to vector<1x1x16xi1>
    %48 = vector.broadcast %47 : vector<1x1x16xi1> to vector<2x8x16xi1>
    %49 = vector.broadcast %cst_19 : f32 to vector<2x8x16xf32>
    %50 = arith.select %48, %36, %49 : vector<2x8x16xi1>, vector<2x8x16xf32>
    %51 = arith.addf %29, %44 : vector<2x8x16xf32>
    %52 = arith.addf %51, %50 : vector<2x8x16xf32>
    %cst_20 = arith.constant 0.333333343 : f32
    %53 = vector.broadcast %cst_20 : f32 to vector<2x8x16xf32>
    %54 = arith.mulf %52, %53 : vector<2x8x16xf32>
    %cst_21 = arith.constant 0.000000e+00 : f32
    %55 = vector.shape_cast %3 : vector<2x1x16xi1> to vector<2x1x16xi1>
    %56 = vector.broadcast %55 : vector<2x1x16xi1> to vector<2x8x16xi1>
    %57 = vector.broadcast %cst_21 : f32 to vector<2x8x16xf32>
    %58 = arith.select %56, %54, %57 : vector<2x8x16xi1>, vector<2x8x16xf32>
    %c0_22 = arith.constant 0 : index
    %c0_23 = arith.constant 0 : index
    %c0_24 = arith.constant 0 : index
    %59 = vector.load %arg5[%c0_22, %c0_23, %c0_24] : memref<2x8x16xf32, #tpu.memory_space<vmem>>, vector<2x8x16xf32>
    tpu.vector_store %arg5[%c0_22, %c0_23, %c0_24], %58 {strides = array<i32>} : memref<2x8x16xf32, #tpu.memory_space<vmem>>, vector<2x8x16xf32>,
    return
  }
  func.func @transform_0(%arg0: i32) -> (i32, i32, i32) {
    %c0_i32 = arith.constant 0 : i32
    %c0_i32_0 = arith.constant 0 : i32
    %c0_i32_1 = arith.constant 0 : i32
    return %arg0, %c0_i32, %c0_i32_0 : i32, i32, i32
  }
  func.func @transform_1(%arg0: i32) -> (i32, i32, i32) {
    %c0_i32 = arith.constant 0 : i32
    %c0_i32_0 = arith.constant 0 : i32
    %c0_i32_1 = arith.constant 0 : i32
    return %arg0, %c0_i32, %c0_i32_0 : i32, i32, i32
  }
  func.func @transform_2(%arg0: i32) -> (i32, i32, i32) {
    %c0_i32 = arith.constant 0 : i32
    %c0_i32_0 = arith.constant 0 : i32
    %c0_i32_1 = arith.constant 0 : i32
    %c0_i32_2 = arith.constant 0 : i32
    return %c0_i32, %c0_i32_0, %c0_i32_1 : i32, i32, i32
  }
  func.func @transform_3(%arg0: i32) -> (i32, i32, i32) {
    %c0_i32 = arith.constant 0 : i32
    %c0_i32_0 = arith.constant 0 : i32
    %c0_i32_1 = arith.constant 0 : i32
    %c0_i32_2 = arith.constant 0 : i32
    return %c0_i32, %c0_i32_0, %c0_i32_1 : i32, i32, i32
  }
  func.func @transform_4(%arg0: i32) -> (i32, i32, i32) {
    %c0_i32 = arith.constant 0 : i32
    %c0_i32_0 = arith.constant 0 : i32
    %c0_i32_1 = arith.constant 0 : i32
    return %arg0, %c0_i32, %c0_i32_0 : i32, i32, i32
  }
}

</mosaic_0001>

<llo_original>
// kernel: tpu_custom_call.1
$region0: #{tpu_custom_call.1}
  #allocation0 [shape = 'u32[]', space=smem, size = 0x4, offset = 0x4, fixed_abs, tag = 'smem constant byte address 0x4 - core index']
  #allocation1 [shape = 'u32[144,128]{1,0:T(1,128)}', space=vmem, size = 0x12000, scoped, tag = 'internal scratch']
  %s0 = inlined_call_operand.vmem [shape: f32[2,8,16], index: 0, kind: input, shape index: {}]
  %s1 = inlined_call_operand.vmem [shape: s32[2,1,16], index: 1, kind: input, shape index: {}]
  %s2 = inlined_call_operand.vmem [shape: f32[1,8,1], index: 2, kind: input, shape index: {}]
  %s3 = inlined_call_operand.vmem [shape: f32[1,8,1], index: 3, kind: input, shape index: {}]
  %s4 = inlined_call_operand.hbm [shape: f32[2,8,16], index: 4, kind: output, shape index: {}]
  %s5 = sld [smem:[#allocation0]]
  $region26: #{tpu_custom_call.1} parent=0
    _
  %s7 = ssub.s32 1, %s5
  %s8 = scalar_select 0, %s7, %s5
  $region1: #{tpu_custom_call.1} parent=0
    #allocation2 [shape = 'u8[8192]{0}', space=vmem, size = 0x2000, scoped, tag = 'output window, operand 0, single buffered']
    #allocation3 [shape = 's32[1]{0}', space=sflag, size = 0x4, scoped, tag = 'scoped memory for tpu_custom_call.1']
    %9 = vsyncpa [#allocation3], 0
    // Predicated region
    $region2: #{tpu_custom_call.1} parent=1 // pred_check
      _
    $region3: #{tpu_custom_call.1} parent=1 // pred_check_branch
      %11 = sbr.rel (0) target = $region5
    $region4: #{tpu_custom_call.1} parent=1 // pred_region
      _
    $region5: #{tpu_custom_call.1} parent=1 // pred_fallthru
      _
    // Predicated region
    $region6: #{tpu_custom_call.1} parent=1 // pred_check
      _
    $region7: #{tpu_custom_call.1} parent=1 // pred_check_branch
      %13 = sbr.rel (0) target = $region9
    $region8: #{tpu_custom_call.1} parent=1 // pred_region
      _
    $region9: #{tpu_custom_call.1} parent=1 // pred_fallthru
      _
    // Predicated region
    $region10: #{tpu_custom_call.1} parent=1 // pred_check
      _
    $region11: #{tpu_custom_call.1} parent=1 // pred_check_branch
      %15 = sbr.rel (0) target = $region13
    $region12: #{tpu_custom_call.1} parent=1 // pred_region
      _
    $region13: #{tpu_custom_call.1} parent=1 // pred_fallthru
      _
    // Predicated region
    $region14: #{tpu_custom_call.1} parent=1 // pred_check
      _
    $region15: #{tpu_custom_call.1} parent=1 // pred_check_branch
      %17 = sbr.rel (0) target = $region17
    $region16: #{tpu_custom_call.1} parent=1 // pred_region
      _
    $region17: #{tpu_custom_call.1} parent=1 // pred_fallthru
      _
    %v18 = vld [vmem:[%s0] sm:$0xff]
    %v19 = vld [vmem:[%s0 + $0x8] sm:$0xff]
    %v20 = vld [vmem:[%s1] sm:$0x1]
    %v21 = vld [vmem:[%s1 + $0x1] sm:$0x1]
    %vm22 = vcmp.eq.s32.totalorder %v20, 1
    %vm23 = vcmp.eq.s32.totalorder %v21, 1
    %vm24 = vcmask 130048
    %v25 = vsel %vm24, %v18, 0.0
    %v26 = vrot.slane %v25, 4
    %v27 = vadd.f32 %v25, %v26
    %v28 = vrot.slane %v27, 2
    %v29 = vadd.f32 %v27, %v28
    %v30 = vrot.slane %v29, 1
    %v31 = vadd.f32 %v29, %v30
    %v32 = vsel %vm24, %v19, 0.0
    %v33 = vrot.slane %v32, 4
    %v34 = vadd.f32 %v32, %v33
    %v35 = vrot.slane %v34, 2
    %v36 = vadd.f32 %v34, %v35
    %v37 = vrot.slane %v36, 1
    %v38 = vadd.f32 %v36, %v37
    %v39 = vrcp.pop 8.0
    %v40 = vmul.f32 %v31, %v39
    %v41 = vmul.f32 %v38, %v39
    %v42 = vsub.f32 %v18, %v40
    %v43 = vsub.f32 %v19, %v41
    %v44 = vmul.f32 %v42, %v42
    %v45 = vmul.f32 %v43, %v43
    %v46 = vsel %vm24, %v44, 0.0
    %v47 = vrot.slane %v46, 4
    %v48 = vadd.f32 %v46, %v47
    %v49 = vrot.slane %v48, 2
    %v50 = vadd.f32 %v48, %v49
    %v51 = vrot.slane %v50, 1
    %v52 = vadd.f32 %v50, %v51
    %v53 = vsel %vm24, %v45, 0.0
    %v54 = vrot.slane %v53, 4
    %v55 = vadd.f32 %v53, %v54
    %v56 = vrot.slane %v55, 2
    %v57 = vadd.f32 %v55, %v56
    %v58 = vrot.slane %v57, 1
    %v59 = vadd.f32 %v57, %v58
    %v60 = vmul.f32 %v52, %v39
    %v61 = vmul.f32 %v59, %v39
    %v62 = vadd.f32 %v60, 1e-05
    %v63 = vadd.f32 %v61, 1e-05
    %v64 = vrsqrt.pop %v62
    %v65 = vrsqrt.pop %v63
    %v66 = vmul.f32 %v42, %v64
    %v67 = vmul.f32 %v43, %v65
    %v68 = vld [vmem:[%s2] sm:$0xff]
    %70 = vset.pattern.permute.xlu0 0
    %71 = vperm.xlu0 %70, %v68
    %v72 = vpop.permute.xlu0 %71
    %v74 = vmul.f32 %v66, %v72
    %v75 = vmul.f32 %v67, %v72
    %v76 = vld [vmem:[%s3] sm:$0xff]
    %78 = vset.pattern.permute.xlu0 0
    %79 = vperm.xlu0 %78, %v76
    %v80 = vpop.permute.xlu0 %79
    %v82 = vadd.f32 %v74, %v80
    %v83 = vadd.f32 %v75, %v80
    %v84 = vsel %vm22, 1, 0
    %v85 = vsel %vm23, 1, 0
    %v86 = vlaneseq
    %v87 = vshrl.u32 %v86, 7
    %v88 = vsub.s32 0, %v87
    %v89 = vrot.slane %v84, %v88
    %v90 = vlaneseq
    %v91 = vshrl.u32 %v90, 7
    %v92 = vsub.s32 0, %v91
    %v93 = vrot.slane %v85, %v92
    %vm94 = vcmp.eq.s32.totalorder %v89, 1
    %vm95 = vcmp.eq.s32.totalorder %v93, 1
    %v96 = vsel %vm94, %v82, 0.0
    %v97 = vsel %vm95, %v83, 0.0
    %v98 = vlaneseq
    %v99 = vand.u32 %v98, 127
    %102 = vrot.lane.b32.xlu0 %v96, 127
    %v103 = vpop.permute.xlu0 %102
    %104 = vrot.lane.b32.xlu0 %v97, 127
    %v105 = vpop.permute.xlu0 %104
    %108 = vrot.lane.b32.xlu0 %v96, 15
    %v109 = vpop.permute.xlu0 %108
    %110 = vrot.lane.b32.xlu0 %v97, 15
    %v111 = vpop.permute.xlu0 %110
    %vm114 = vcmask 121856
    %v115 = vsel %vm114, %v103, %v109
    %v116 = vsel %vm114, %v105, %v111
    %117 = vrot.lane.b32.xlu0 %v96, 113
    %v118 = vpop.permute.xlu0 %117
    %119 = vrot.lane.b32.xlu0 %v97, 113
    %v120 = vpop.permute.xlu0 %119
    %123 = vrot.lane.b32.xlu0 %v96, 1
    %v124 = vpop.permute.xlu0 %123
    %125 = vrot.lane.b32.xlu0 %v97, 1
    %v126 = vpop.permute.xlu0 %125
    %vm129 = vcmask 7168
    %v130 = vsel %vm129, %v118, %v124
    %v131 = vsel %vm129, %v120, %v126
    %v132 = vadd.s32 %v99, 1
    %vm133 = vcmp.lt.s32.totalorder %v132, 16
    %v134 = vsel %vm133, 1, 0
    %vm135 = vcmp.eq.s32.totalorder %v134, 1
    %v136 = vsel %vm135, %v115, 0.0
    %v137 = vsel %vm135, %v116, 0.0
    %vm138 = vcmp.ge.s32.totalorder %v99, 1
    %v139 = vsel %vm138, 1, 0
    %vm140 = vcmp.eq.s32.totalorder %v139, 1
    %v141 = vsel %vm140, %v130, 0.0
    %v142 = vsel %vm140, %v131, 0.0
    %v143 = vadd.f32 %v96, %v136
    %v144 = vadd.f32 %v97, %v137
    %v145 = vadd.f32 %v143, %v141
    %v146 = vadd.f32 %v144, %v142
    %v147 = vmul.f32 %v145, 0.33333334
    %v148 = vmul.f32 %v146, 0.33333334
    %v149 = vsel %vm94, %v147, 0.0
    %v150 = vsel %vm95, %v148, 0.0
    %151 = vst.msk [vmem:[#allocation2] sm:$0xff] %vm24, %v149
    %152 = vst.msk [vmem:[#allocation2 + $0x8] sm:$0xff] %vm24, %v150
    // Predicated region
    $region18: #{tpu_custom_call.1} parent=1 // pred_check
      _
    $region19: #{tpu_custom_call.1} parent=1 // pred_check_branch
      %154 = sbr.rel (0) target = $region21
    $region20: #{tpu_custom_call.1} parent=1 // pred_region
      %s156 = ssub.s32 256, 256
      %157 = vsyncadd [#allocation3], %s156
      %s158 = sshll.u32 [#allocation2], 4
      %s159 = int_to_ptr.vmem [resolvable:$true] %s158
      %164 = dma.vmem_to_hbm [thread:$0]  %s159, 256, %s4, [#allocation3], 128, 128, 8
    $region21: #{tpu_custom_call.1} parent=1 // pred_fallthru
      _
    // Predicated region
    $region22: #{tpu_custom_call.1} parent=1 // pred_check
      _
    $region23: #{tpu_custom_call.1} parent=1 // pred_check_branch
      %166 = sbr.rel (0) target = $region25
    $region24: #{tpu_custom_call.1} parent=1 // pred_region
      %167 = dma.done [#allocation3], 256
    $region25: #{tpu_custom_call.1} parent=1 // pred_fallthru
      _
    %168 = vsyncpa [#allocation3], 1

</llo_original>
